<compile_context>
chip_gen: v6e
topology: v6e:2x2x1
jax: 0.10.0
libtpu: 0.0.40
codegen_flags: <defaults>
</compile_context>

<pallas_src>
import functools

import numpy as np
import jax
import jax.numpy as jnp
from jax import lax
from jax.experimental import pallas as pl
from jax.experimental.pallas import tpu as pltpu

BG_LABEL = 400
POSITIVE_FRACTION = 0.25
IOU_THRESHOLD = 0.4
_LANE = 128
_SUBLANE = 8


def _round_up(x, m):
    return ((x + m - 1) // m) * m


def _assigner_kernel(cls_ref, pbox_ref, gt_ref, packed_ref, topk_ref, *cost_refs, max_k):
    """Cost matrix + Matcher + per-gt top-k for a block of G images.

    cls_ref    : (G, M, N) f32  raw logits gathered at each gt's class (gt x query)
    pbox_ref   : (G, 8, N) f32  rows 0-3 = cx,cy,w,h ; row 4 = query-valid
    gt_ref     : (G, M, 8) f32  cols 0-3 = cx,cy,w,h ; col 4 = gt-valid
    packed_ref : (G, 8, N) f32  row0 = matched gt idx, row1 = matched val, row2 = label
    topk_ref   : (G, M, 128) f32 lanes 0..max_k-1 = top-k query index per gt
    cost_refs  : optionally one (G, M, N) f32 ref for the full cost matrix (C.T)
    """
    cls_raw = cls_ref[...]                                   # (G, M, N)
    pb = pbox_ref[...]                                       # (G, 8, N)
    gt = gt_ref[...]                                         # (G, M, 8)
    g_dim, m_dim, n_dim = cls_raw.shape

    # ---- gt / pred box columns (tiny slices + broadcasts) ----
    gcx = gt[:, :, 0:1]; gcy = gt[:, :, 1:2]
    gw = gt[:, :, 2:3];  gh = gt[:, :, 3:4]
    gvalid = gt[:, :, 4:5] > 0.0                             # (G, M, 1)

    pcx = pb[:, 0:1, :]; pcy = pb[:, 1:2, :]
    pw = pb[:, 2:3, :];  ph = pb[:, 3:4, :]
    qvalid = pb[:, 4:5, :] > 0.0                             # (G, 1, N)

    # ---- pairwise IoU (cxcywh -> xyxy), gt rows (sublanes) vs query lanes ----
    px1 = pcx - 0.5 * pw; px2 = pcx + 0.5 * pw
    py1 = pcy - 0.5 * ph; py2 = pcy + 0.5 * ph
    gx1 = gcx - 0.5 * gw; gx2 = gcx + 0.5 * gw
    gy1 = gcy - 0.5 * gh; gy2 = gcy + 0.5 * gh

    iw = jnp.maximum(jnp.minimum(px2, gx2) - jnp.maximum(px1, gx1), 0.0)
    ih = jnp.maximum(jnp.minimum(py2, gy2) - jnp.maximum(py1, gy1), 0.0)
    inter = iw * ih                                          # (G, M, N)
    parea = (px2 - px1) * (py2 - py1)                        # (G, 1, N)
    garea = (gx2 - gx1) * (gy2 - gy1)                        # (G, M, 1)
    union = parea + garea - inter
    pos_union = union > 0.0
    iou = jnp.where(pos_union, inter / jnp.where(pos_union, union, 1.0), 0.0)

    # ---- sigmoid AFTER the class gather (small tile -> little EUP work) ----
    cost = 0.8 * iou + 0.2 * jax.nn.sigmoid(cls_raw)         # (G, M, N)

    # ---- Matcher: per-query max / argmax over valid gts, thresholds {0.4} ----
    cost_gm = jnp.where(gvalid, cost, -1.0)                  # valid cost is >= 0
    vals = jnp.max(cost_gm, axis=1, keepdims=True)           # (G, 1, N)
    row_idx = lax.broadcasted_iota(jnp.int32, (g_dim, m_dim, n_dim), 1)
    matches = jnp.min(jnp.where(cost_gm == vals, row_idx, m_dim),
                      axis=1, keepdims=True)                 # (G, 1, N)
    base_label = jnp.where(vals < IOU_THRESHOLD, 0, 1)       # (G, 1, N)

    # ---- per-gt top-k over real query lanes (k=0 also gives the low-quality argmax) ----
    col_idx = lax.broadcasted_iota(jnp.int32, (g_dim, m_dim, n_dim), 2)
    lane_iota = lax.broadcasted_iota(jnp.int32, (g_dim, m_dim, _LANE), 2)
    work = jnp.where(qvalid, cost, -1.0)
    topk_slab = jnp.zeros((g_dim, m_dim, _LANE), jnp.float32)
    best0 = None
    for k in range(max_k):
        v_k = jnp.max(work, axis=2, keepdims=True)           # (G, M, 1)
        i_k = jnp.min(jnp.where(work == v_k, col_idx, n_dim),
                      axis=2, keepdims=True)                 # (G, M, 1)
        if k == 0:
            best0 = i_k
        topk_slab = topk_slab + jnp.where(lane_iota == k, i_k.astype(jnp.float32), 0.0)
        if k + 1 < max_k:
            work = jnp.where(col_idx == i_k, -1.0, work)
    topk_ref[...] = topk_slab

    # ---- allow_low_quality_matches: argmax query of each valid gt gets label 1 ----
    is_low_q = jnp.max(jnp.where((col_idx == best0) & gvalid, 1, 0),
                       axis=1, keepdims=True) > 0            # (G, 1, N)
    labels = jnp.where(is_low_q, 1, base_label)

    # ---- single lane-dense (G, 8, N) output slab ----
    row_sel = lax.broadcasted_iota(jnp.int32, (g_dim, 8, n_dim), 1)
    packed = (jnp.where(row_sel == 0, matches.astype(jnp.float32), 0.0)
              + jnp.where(row_sel == 1, vals, 0.0)
              + jnp.where(row_sel == 2, labels.astype(jnp.float32), 0.0))
    packed_ref[...] = packed

    if cost_refs:                                            # only when return_cost_matrix
        cost_refs[0][...] = cost


def _match_call(cls_in, pbox, gt_meta, *, images_per_step, with_cost, max_k):
    bs_pad, m_pad, n_pad = cls_in.shape
    g = images_per_step
    steps = bs_pad // g
    idx = lambda s: (s, 0, 0)

    out_shape = [
        jax.ShapeDtypeStruct((bs_pad, 8, n_pad), jnp.float32),      # matches / vals / labels
        jax.ShapeDtypeStruct((bs_pad, m_pad, _LANE), jnp.float32),  # per-gt top-k indices
    ]
    out_specs = [
        pl.BlockSpec((g, 8, n_pad), idx),
        pl.BlockSpec((g, m_pad, _LANE), idx),
    ]
    if with_cost:
        out_shape.append(jax.ShapeDtypeStruct((bs_pad, m_pad, n_pad), jnp.float32))
        out_specs.append(pl.BlockSpec((g, m_pad, n_pad), idx))

    kernel = functools.partial(_assigner_kernel, max_k=max_k)
    return pl.pallas_call(
        kernel,
        out_shape=tuple(out_shape),
        grid_spec=pltpu.PrefetchScalarGridSpec(
            num_scalar_prefetch=0,
            grid=(steps,),
            in_specs=[
                pl.BlockSpec((g, m_pad, n_pad), idx),
                pl.BlockSpec((g, 8, n_pad), idx),
                pl.BlockSpec((g, m_pad, 8), idx),
            ],
            out_specs=tuple(out_specs),
        ),
        compiler_params=pltpu.CompilerParams(
            dimension_semantics=("parallel",)),   # images are independent
    )(cls_in, pbox, gt_meta)


@functools.partial(jax.jit, static_argnames=("images_per_step", "with_cost", "max_k"))
def _pack_and_match(pred_logits, pred_boxes, gt_boxes_p, gt_classes_p,
                    *, images_per_step, with_cost, max_k):
    """Pad/pack the whole batch and run the matcher kernel (single dispatch)."""
    bs, n, c = pred_logits.shape
    m_pad = gt_boxes_p.shape[1]
    n_pad = _round_up(n, _LANE)
    g = images_per_step
    bs_pad = _round_up(bs, g)

    # Per-gt class gather as a tiny one-hot dot (f32, HIGHEST precision); XLA's dot
    # absorbs the (query x class) -> (gt x query) layout change, so no padded
    # transposed-logits round trip.  Sigmoid stays in the kernel.
    onehot = (gt_classes_p[..., None]
              == jnp.arange(c, dtype=jnp.int32)[None, None, :]).astype(jnp.float32)
    gathered = jnp.einsum('bmc,bqc->bmq', onehot, pred_logits,
                          precision=jax.lax.Precision.HIGHEST)        # (bs, m_pad, n)

    cls_in = jnp.zeros((bs_pad, m_pad, n_pad), jnp.float32)
    cls_in = cls_in.at[:bs, :, :n].set(gathered)

    # pred boxes: (bs, n, 4) -> (bs_pad, 8, n_pad); row 4 = query-valid mask.
    pbox = jnp.zeros((bs_pad, 8, n_pad), jnp.float32)
    pbox = pbox.at[:bs, :4, :n].set(jnp.transpose(pred_boxes, (0, 2, 1)))
    pbox = pbox.at[:bs, 4, :n].set(1.0)

    # gt metadata: cols 0-3 = box, col 4 = valid flag.
    gt_meta = jnp.zeros((bs_pad, m_pad, 8), jnp.float32)
    gt_meta = gt_meta.at[:bs, :, :4].set(gt_boxes_p)
    gt_meta = gt_meta.at[:bs, :, 4].set((gt_classes_p >= 0).astype(jnp.float32))

    return _match_call(cls_in, pbox, gt_meta,
                       images_per_step=g, with_cost=with_cost, max_k=max_k)


def _choose_images_per_step(bs):
    if bs <= 1:
        return 1
    # Keep >= 2 grid steps (v7x has two TensorCores) while amortizing per-step
    # overhead over several images.
    return max(1, min(8, bs // 2))


def stage2_assigner_forward(outputs, targets, num_queries, max_k=6,
                            return_cost_matrix=False):
    """JAX/Pallas port of Stage2Assigner.forward."""
    bs = len(targets)
    pred_logits = jnp.asarray(outputs["pred_logits"], jnp.float32)    # (bs, N, C)
    pred_boxes = jnp.asarray(outputs["pred_boxes"], jnp.float32)      # (bs, N, 4)
    _, n, _ = pred_logits.shape

    num_gts = [int(np.asarray(t["boxes"]).shape[0]) for t in targets]
    m_pad = max(_SUBLANE, _round_up(max(num_gts) if num_gts else 1, _SUBLANE))

    gt_boxes_p = np.zeros((bs, m_pad, 4), np.float32)
    gt_classes_p = np.full((bs, m_pad), -1, np.int32)
    for b in range(bs):
        m = num_gts[b]
        if m > 0:
            gt_boxes_p[b, :m] = np.asarray(targets[b]["boxes"], np.float32)
            gt_classes_p[b, :m] = np.asarray(targets[b]["labels"], np.int32)

    g = _choose_images_per_step(bs)
    outs = _pack_and_match(pred_logits, pred_boxes,
                           jnp.asarray(gt_boxes_p), jnp.asarray(gt_classes_p),
                           images_per_step=g, with_cost=return_cost_matrix,
                           max_k=max_k)
    outs = jax.block_until_ready(outs)

    if return_cost_matrix:
        packed_out, topk_out, cost_out = outs
        cost_all = np.asarray(cost_out)          # (bs_pad, m_pad, n_pad)
    else:
        packed_out, topk_out = outs
        cost_all = None
    packed_all = np.asarray(packed_out)          # (bs_pad, 8, n_pad)
    topk_all = np.asarray(topk_out)              # (bs_pad, m_pad, 128)

    # TODO(synk): torch.randperm is nondeterministic; a seeded numpy permutation is used instead.
    rng = np.random.RandomState(0)
    indices = []
    cost_matrices = []

    for b in range(bs):
        m = num_gts[b]
        matched_idxs = packed_all[b, 0, :n].astype(np.int64)
        matched_labels = packed_all[b, 2, :n].astype(np.int8)
        gt_classes_np = gt_classes_p[b, :m].astype(np.int64)

        # ---- _sample_proposals (host glue; data-dependent output sizes) ----
        if m > 0:
            prop_cls = gt_classes_np[matched_idxs]
            prop_cls = np.where(matched_labels == 0, BG_LABEL, prop_cls)
            # matcher labels are in {0, 1}; the original '== -1' ignore branch is unreachable
        else:
            prop_cls = np.full_like(matched_idxs, BG_LABEL)

        positive = np.nonzero((prop_cls != -1) & (prop_cls != BG_LABEL))[0]
        negative = np.nonzero(prop_cls == BG_LABEL)[0]
        num_pos = int(num_queries * POSITIVE_FRACTION)
        num_pos = min(positive.size, num_pos)
        num_neg = min(negative.size, num_queries - num_pos)
        perm1 = rng.permutation(positive.size)[:num_pos]
        perm2 = rng.permutation(negative.size)[:num_neg]
        sampled_idxs = np.concatenate([positive[perm1], negative[perm2]], axis=0)
        sampled_gt_classes = prop_cls[sampled_idxs]

        pos_pr_inds = sampled_idxs[sampled_gt_classes != BG_LABEL].astype(np.int64)
        pos_gt_inds = matched_idxs[pos_pr_inds]

        # ---- sample_topk postprocess using the in-kernel per-gt top-k ----
        if pos_gt_inds.size > 0:
            gt_inds2, counts = np.unique(pos_gt_inds, return_counts=True)
            topk_rows = topk_all[b, gt_inds2, :max_k].astype(np.int64)   # (Gt, max_k)
            pos_pr_inds = np.concatenate(
                [topk_rows[i, :min(int(cnt), max_k)]
                 for i, cnt in enumerate(counts)]).astype(np.int64)
            pos_gt_inds = np.concatenate(
                [np.full((min(int(cnt), max_k),), int(gt_id), dtype=np.int64)
                 for gt_id, cnt in zip(gt_inds2, counts)])

        indices.append((pos_pr_inds, pos_gt_inds))
        if return_cost_matrix:
            cost_matrices.append(cost_all[b, :m, :n])

    if return_cost_matrix:
        return indices, cost_matrices
    return indices


if __name__ == "__main__":
    key = jax.random.PRNGKey(0)
    bs = 2
    num_queries = 128
    num_classes = 16
    max_k = 6
    num_gts = [5, 3]

    k1, k2, k3, k4 = jax.random.split(key, 4)
    pred_logits = jax.random.normal(k1, (bs, num_queries, num_classes), jnp.float32)
    p_cxcy = jax.random.uniform(k2, (bs, num_queries, 2), minval=0.2, maxval=0.8)
    p_wh = jax.random.uniform(k3, (bs, num_queries, 2), minval=0.05, maxval=0.4)
    pred_boxes = jnp.concatenate([p_cxcy, p_wh], axis=-1)

    targets = []
    for b in range(bs):
        kb1, kb2, kb3 = jax.random.split(jax.random.fold_in(k4, b), 3)
        g_cxcy = jax.random.uniform(kb1, (num_gts[b], 2), minval=0.2, maxval=0.8)
        g_wh = jax.random.uniform(kb2, (num_gts[b], 2), minval=0.05, maxval=0.4)
        g_boxes = jnp.concatenate([g_cxcy, g_wh], axis=-1)
        g_labels = jax.random.randint(kb3, (num_gts[b],), 0, num_classes)
        targets.append({"boxes": g_boxes, "labels": g_labels})

    outputs = {"pred_logits": pred_logits, "pred_boxes": pred_boxes}

    # Default path: in-kernel top-k, no cost-matrix output.
    indices = stage2_assigner_forward(outputs, targets, num_queries=num_queries,
                                      max_k=max_k)
    for b, (pr, gt) in enumerate(indices):
        assert pr.shape == gt.shape
        assert pr.size == 0 or (pr.min() >= 0 and pr.max() < num_queries)
        assert gt.size == 0 or (gt.min() >= 0 and gt.max() < num_gts[b])

    # Cost-matrix path + numpy reference check of the cost matrix.
    indices2, cost_matrices = stage2_assigner_forward(
        outputs, targets, num_queries=num_queries, max_k=max_k,
        return_cost_matrix=True)

    logits_np = np.asarray(pred_logits)
    boxes_np = np.asarray(pred_boxes)

    def _xyxy(x):
        cx, cy, w, h = x[:, 0], x[:, 1], x[:, 2], x[:, 3]
        return np.stack([cx - 0.5 * w, cy - 0.5 * h, cx + 0.5 * w, cy + 0.5 * h], axis=1)

    for b in range(bs):
        gt_b = np.asarray(targets[b]["boxes"], np.float32)
        cls_b = np.asarray(targets[b]["labels"], np.int64)
        prob = 1.0 / (1.0 + np.exp(-logits_np[b]))                   # (N, C)
        cost_class = prob[:, cls_b]                                   # (N, M)
        pbx = _xyxy(boxes_np[b]); gbx = _xyxy(gt_b)
        iw = np.maximum(np.minimum(pbx[:, None, 2], gbx[None, :, 2])
                        - np.maximum(pbx[:, None, 0], gbx[None, :, 0]), 0.0)
        ih = np.maximum(np.minimum(pbx[:, None, 3], gbx[None, :, 3])
                        - np.maximum(pbx[:, None, 1], gbx[None, :, 1]), 0.0)
        inter = iw * ih
        pa = (pbx[:, 2] - pbx[:, 0]) * (pbx[:, 3] - pbx[:, 1])
        ga = (gbx[:, 2] - gbx[:, 0]) * (gbx[:, 3] - gbx[:, 1])
        union = pa[:, None] + ga[None, :] - inter
        iou = np.where(union > 0, inter / np.where(union > 0, union, 1.0), 0.0)
        ref_ct = (0.8 * iou + 0.2 * cost_class).T                     # (M, N) == PyTorch C.T
        np.testing.assert_allclose(cost_matrices[b], ref_ct, rtol=1e-3, atol=1e-4)

    for pr, gt in indices2:
        assert pr.shape == gt.shape

    print("KERNEL_OK")
</pallas_src>

<mosaic_0001>
module attributes {stable_mosaic.version = 11 : i64} {
  func.func @_assigner_kernel(%arg0: i32, %arg1: memref<1x8x128xf32, #tpu.memory_space<vmem>>, %arg2: memref<1x8x128xf32, #tpu.memory_space<vmem>>, %arg3: memref<1x8x8xf32, #tpu.memory_space<vmem>>, %arg4: memref<1x8x128xf32, #tpu.memory_space<vmem>>, %arg5: memref<1x8x128xf32, #tpu.memory_space<vmem>>) attributes {dimension_semantics = [#tpu.dimension_semantics<parallel>], iteration_bounds = array<i64: 2>, scalar_prefetch = 0 : i64, scratch_operands = 0 : i64, tpu.core_type = #tpu.core_type<tc>, window_params = [{transform_indices = @transform_0, window_bounds = array<i64: 1, 8, 128>}, {transform_indices = @transform_1, window_bounds = array<i64: 1, 8, 128>}, {transform_indices = @transform_2, window_bounds = array<i64: 1, 8, 8>}, {transform_indices = @transform_3, window_bounds = array<i64: 1, 8, 128>}, {transform_indices = @transform_4, window_bounds = array<i64: 1, 8, 128>}]} {
    %c0 = arith.constant 0 : index
    %c0_0 = arith.constant 0 : index
    %c0_1 = arith.constant 0 : index
    %0 = vector.load %arg1[%c0, %c0_0, %c0_1] : memref<1x8x128xf32, #tpu.memory_space<vmem>>, vector<1x8x128xf32>
    %c0_2 = arith.constant 0 : index
    %c0_3 = arith.constant 0 : index
    %c0_4 = arith.constant 0 : index
    %1 = vector.load %arg2[%c0_2, %c0_3, %c0_4] : memref<1x8x128xf32, #tpu.memory_space<vmem>>, vector<1x8x128xf32>
    %c0_5 = arith.constant 0 : index
    %c0_6 = arith.constant 0 : index
    %c0_7 = arith.constant 0 : index
    %2 = vector.load %arg3[%c0_5, %c0_6, %c0_7] : memref<1x8x8xf32, #tpu.memory_space<vmem>>, vector<1x8x8xf32>
    %3 = vector.extract_strided_slice %2 {offsets = [0, 0, 0], sizes = [1, 8, 1], strides = [1, 1, 1]} : vector<1x8x8xf32> to vector<1x8x1xf32>
    %4 = vector.extract_strided_slice %2 {offsets = [0, 0, 1], sizes = [1, 8, 1], strides = [1, 1, 1]} : vector<1x8x8xf32> to vector<1x8x1xf32>
    %5 = vector.extract_strided_slice %2 {offsets = [0, 0, 2], sizes = [1, 8, 1], strides = [1, 1, 1]} : vector<1x8x8xf32> to vector<1x8x1xf32>
    %6 = vector.extract_strided_slice %2 {offsets = [0, 0, 3], sizes = [1, 8, 1], strides = [1, 1, 1]} : vector<1x8x8xf32> to vector<1x8x1xf32>
    %7 = vector.extract_strided_slice %2 {offsets = [0, 0, 4], sizes = [1, 8, 1], strides = [1, 1, 1]} : vector<1x8x8xf32> to vector<1x8x1xf32>
    %cst = arith.constant 0.000000e+00 : f32
    %8 = vector.broadcast %cst : f32 to vector<1x8x1xf32>
    %9 = arith.cmpf ogt, %7, %8 : vector<1x8x1xf32>
    %10 = vector.extract_strided_slice %1 {offsets = [0, 0, 0], sizes = [1, 1, 128], strides = [1, 1, 1]} : vector<1x8x128xf32> to vector<1x1x128xf32>
    %11 = vector.extract_strided_slice %1 {offsets = [0, 1, 0], sizes = [1, 1, 128], strides = [1, 1, 1]} : vector<1x8x128xf32> to vector<1x1x128xf32>
    %12 = vector.extract_strided_slice %1 {offsets = [0, 2, 0], sizes = [1, 1, 128], strides = [1, 1, 1]} : vector<1x8x128xf32> to vector<1x1x128xf32>
    %13 = vector.extract_strided_slice %1 {offsets = [0, 3, 0], sizes = [1, 1, 128], strides = [1, 1, 1]} : vector<1x8x128xf32> to vector<1x1x128xf32>
    %14 = vector.extract_strided_slice %1 {offsets = [0, 4, 0], sizes = [1, 1, 128], strides = [1, 1, 1]} : vector<1x8x128xf32> to vector<1x1x128xf32>
    %cst_8 = arith.constant 0.000000e+00 : f32
    %15 = vector.broadcast %cst_8 : f32 to vector<1x1x128xf32>
    %16 = arith.cmpf ogt, %14, %15 : vector<1x1x128xf32>
    %cst_9 = arith.constant 5.000000e-01 : f32
    %17 = vector.broadcast %cst_9 : f32 to vector<1x1x128xf32>
    %18 = arith.mulf %17, %12 : vector<1x1x128xf32>
    %19 = arith.subf %10, %18 : vector<1x1x128xf32>
    %cst_10 = arith.constant 5.000000e-01 : f32
    %20 = vector.broadcast %cst_10 : f32 to vector<1x1x128xf32>
    %21 = arith.mulf %20, %12 : vector<1x1x128xf32>
    %22 = arith.addf %10, %21 : vector<1x1x128xf32>
    %cst_11 = arith.constant 5.000000e-01 : f32
    %23 = vector.broadcast %cst_11 : f32 to vector<1x1x128xf32>
    %24 = arith.mulf %23, %13 : vector<1x1x128xf32>
    %25 = arith.subf %11, %24 : vector<1x1x128xf32>
    %cst_12 = arith.constant 5.000000e-01 : f32
    %26 = vector.broadcast %cst_12 : f32 to vector<1x1x128xf32>
    %27 = arith.mulf %26, %13 : vector<1x1x128xf32>
    %28 = arith.addf %11, %27 : vector<1x1x128xf32>
    %cst_13 = arith.constant 5.000000e-01 : f32
    %29 = vector.broadcast %cst_13 : f32 to vector<1x8x1xf32>
    %30 = arith.mulf %29, %5 : vector<1x8x1xf32>
    %31 = arith.subf %3, %30 : vector<1x8x1xf32>
    %cst_14 = arith.constant 5.000000e-01 : f32
    %32 = vector.broadcast %cst_14 : f32 to vector<1x8x1xf32>
    %33 = arith.mulf %32, %5 : vector<1x8x1xf32>
    %34 = arith.addf %3, %33 : vector<1x8x1xf32>
    %cst_15 = arith.constant 5.000000e-01 : f32
    %35 = vector.broadcast %cst_15 : f32 to vector<1x8x1xf32>
    %36 = arith.mulf %35, %6 : vector<1x8x1xf32>
    %37 = arith.subf %4, %36 : vector<1x8x1xf32>
    %cst_16 = arith.constant 5.000000e-01 : f32
    %38 = vector.broadcast %cst_16 : f32 to vector<1x8x1xf32>
    %39 = arith.mulf %38, %6 : vector<1x8x1xf32>
    %40 = arith.addf %4, %39 : vector<1x8x1xf32>
    %41 = vector.broadcast %22 : vector<1x1x128xf32> to vector<1x8x128xf32>
    %42 = vector.broadcast %34 : vector<1x8x1xf32> to vector<1x8x128xf32>
    %43 = arith.minimumf %41, %42 : vector<1x8x128xf32>
    %44 = vector.broadcast %19 : vector<1x1x128xf32> to vector<1x8x128xf32>
    %45 = vector.broadcast %31 : vector<1x8x1xf32> to vector<1x8x128xf32>
    %46 = arith.maximumf %44, %45 : vector<1x8x128xf32>
    %47 = arith.subf %43, %46 : vector<1x8x128xf32>
    %cst_17 = arith.constant 0.000000e+00 : f32
    %48 = vector.broadcast %cst_17 : f32 to vector<1x8x128xf32>
    %49 = arith.maximumf %47, %48 : vector<1x8x128xf32>
    %50 = vector.broadcast %28 : vector<1x1x128xf32> to vector<1x8x128xf32>
    %51 = vector.broadcast %40 : vector<1x8x1xf32> to vector<1x8x128xf32>
    %52 = arith.minimumf %50, %51 : vector<1x8x128xf32>
    %53 = vector.broadcast %25 : vector<1x1x128xf32> to vector<1x8x128xf32>
    %54 = vector.broadcast %37 : vector<1x8x1xf32> to vector<1x8x128xf32>
    %55 = arith.maximumf %53, %54 : vector<1x8x128xf32>
    %56 = arith.subf %52, %55 : vector<1x8x128xf32>
    %cst_18 = arith.constant 0.000000e+00 : f32
    %57 = vector.broadcast %cst_18 : f32 to vector<1x8x128xf32>
    %58 = arith.maximumf %56, %57 : vector<1x8x128xf32>
    %59 = arith.mulf %49, %58 : vector<1x8x128xf32>
    %60 = arith.subf %22, %19 : vector<1x1x128xf32>
    %61 = arith.subf %28, %25 : vector<1x1x128xf32>
    %62 = arith.mulf %60, %61 : vector<1x1x128xf32>
    %63 = arith.subf %34, %31 : vector<1x8x1xf32>
    %64 = arith.subf %40, %37 : vector<1x8x1xf32>
    %65 = arith.mulf %63, %64 : vector<1x8x1xf32>
    %66 = vector.broadcast %62 : vector<1x1x128xf32> to vector<1x8x128xf32>
    %67 = vector.broadcast %65 : vector<1x8x1xf32> to vector<1x8x128xf32>
    %68 = arith.addf %66, %67 : vector<1x8x128xf32>
    %69 = arith.subf %68, %59 : vector<1x8x128xf32>
    %cst_19 = arith.constant 0.000000e+00 : f32
    %70 = vector.broadcast %cst_19 : f32 to vector<1x8x128xf32>
    %71 = arith.cmpf ogt, %69, %70 : vector<1x8x128xf32>
    %cst_20 = arith.constant 1.000000e+00 : f32
    %72 = vector.broadcast %cst_20 : f32 to vector<1x8x128xf32>
    %73 = arith.select %71, %69, %72 : vector<1x8x128xi1>, vector<1x8x128xf32>
    %74 = arith.divf %59, %73 : vector<1x8x128xf32>
    %cst_21 = arith.constant 0.000000e+00 : f32
    %75 = vector.broadcast %cst_21 : f32 to vector<1x8x128xf32>
    %76 = arith.select %71, %74, %75 : vector<1x8x128xi1>, vector<1x8x128xf32>
    %cst_22 = arith.constant 8.000000e-01 : f32
    %77 = vector.broadcast %cst_22 : f32 to vector<1x8x128xf32>
    %78 = arith.mulf %77, %76 : vector<1x8x128xf32>
    %79 = arith.negf %0 : vector<1x8x128xf32>
    %80 = math.exp %79 : vector<1x8x128xf32>
    %cst_23 = arith.constant 1.000000e+00 : f32
    %81 = vector.broadcast %cst_23 : f32 to vector<1x8x128xf32>
    %82 = arith.addf %81, %80 : vector<1x8x128xf32>
    %83 = arith.divf %81, %82 : vector<1x8x128xf32>
    %cst_24 = arith.constant 2.000000e-01 : f32
    %84 = vector.broadcast %cst_24 : f32 to vector<1x8x128xf32>
    %85 = arith.mulf %84, %83 : vector<1x8x128xf32>
    %86 = arith.addf %78, %85 : vector<1x8x128xf32>
    %cst_25 = arith.constant -1.000000e+00 : f32
    %87 = vector.shape_cast %9 : vector<1x8x1xi1> to vector<1x8x1xi1>
    %88 = vector.broadcast %87 : vector<1x8x1xi1> to vector<1x8x128xi1>
    %89 = vector.broadcast %cst_25 : f32 to vector<1x8x128xf32>
    %90 = arith.select %88, %86, %89 : vector<1x8x128xi1>, vector<1x8x128xf32>
    %cst_26 = arith.constant dense<0xFF800000> : vector<1x128xf32>
    %91 = vector.multi_reduction <maximumf>, %90, %cst_26 [1] : vector<1x8x128xf32> to vector<1x128xf32>
    %92 = vector.shape_cast %91 : vector<1x128xf32> to vector<1x1x128xf32>
    %93 = tpu.iota {dimensions = array<i32: 1>} : vector<1x8x128xi32>
    %94 = vector.broadcast %92 : vector<1x1x128xf32> to vector<1x8x128xf32>
    %95 = arith.cmpf oeq, %90, %94 : vector<1x8x128xf32>
    %c8_i32 = arith.constant 8 : i32
    %96 = vector.broadcast %c8_i32 : i32 to vector<1x8x128xi32>
    %97 = arith.select %95, %93, %96 : vector<1x8x128xi1>, vector<1x8x128xi32>
    %cst_27 = arith.constant dense<2147483647> : vector<1x128xi32>
    %98 = vector.multi_reduction <minsi>, %97, %cst_27 [1] : vector<1x8x128xi32> to vector<1x128xi32>
    %99 = vector.shape_cast %98 : vector<1x128xi32> to vector<1x1x128xi32>
    %cst_28 = arith.constant 4.000000e-01 : f32
    %100 = vector.broadcast %cst_28 : f32 to vector<1x1x128xf32>
    %101 = arith.cmpf olt, %92, %100 : vector<1x1x128xf32>
    %c0_i32 = arith.constant 0 : i32
    %c1_i32 = arith.constant 1 : i32
    %102 = vector.broadcast %c0_i32 : i32 to vector<1x1x128xi32>
    %103 = vector.broadcast %c1_i32 : i32 to vector<1x1x128xi32>
    %104 = arith.select %101, %102, %103 : vector<1x1x128xi1>, vector<1x1x128xi32>
    %105 = tpu.iota {dimensions = array<i32: 2>} : vector<1x8x128xi32>
    %106 = tpu.iota {dimensions = array<i32: 2>} : vector<1x8x128xi32>
    %cst_29 = arith.constant -1.000000e+00 : f32
    %107 = vector.shape_cast %16 : vector<1x1x128xi1> to vector<1x1x128xi1>
    %108 = vector.broadcast %107 : vector<1x1x128xi1> to vector<1x8x128xi1>
    %109 = vector.broadcast %cst_29 : f32 to vector<1x8x128xf32>
    %110 = arith.select %108, %86, %109 : vector<1x8x128xi1>, vector<1x8x128xf32>
    %cst_30 = arith.constant 0.000000e+00 : f32
    %111 = vector.broadcast %cst_30 : f32 to vector<1x8x128xf32>
    %cst_31 = arith.constant dense<0xFF800000> : vector<1x8xf32>
    %112 = vector.multi_reduction <maximumf>, %110, %cst_31 [2] : vector<1x8x128xf32> to vector<1x8xf32>
    %113 = vector.shape_cast %112 : vector<1x8xf32> to vector<1x8x1xf32>
    %114 = vector.broadcast %113 : vector<1x8x1xf32> to vector<1x8x128xf32>
    %115 = arith.cmpf oeq, %110, %114 : vector<1x8x128xf32>
    %c128_i32 = arith.constant 128 : i32
    %116 = vector.broadcast %c128_i32 : i32 to vector<1x8x128xi32>
    %117 = arith.select %115, %105, %116 : vector<1x8x128xi1>, vector<1x8x128xi32>
    %cst_32 = arith.constant dense<2147483647> : vector<1x8xi32>
    %118 = vector.multi_reduction <minsi>, %117, %cst_32 [2] : vector<1x8x128xi32> to vector<1x8xi32>
    %119 = vector.shape_cast %118 : vector<1x8xi32> to vector<1x8x1xi32>
    %c0_i32_33 = arith.constant 0 : i32
    %120 = vector.broadcast %c0_i32_33 : i32 to vector<1x8x128xi32>
    %121 = arith.cmpi eq, %106, %120 : vector<1x8x128xi32>
    %122 = arith.sitofp %119 : vector<1x8x1xi32> to vector<1x8x1xf32>
    %cst_34 = arith.constant 0.000000e+00 : f32
    %123 = vector.shape_cast %122 : vector<1x8x1xf32> to vector<1x8x1xf32>
    %124 = vector.broadcast %123 : vector<1x8x1xf32> to vector<1x8x128xf32>
    %125 = vector.broadcast %cst_34 : f32 to vector<1x8x128xf32>
    %126 = arith.select %121, %124, %125 : vector<1x8x128xi1>, vector<1x8x128xf32>
    %127 = arith.addf %111, %126 : vector<1x8x128xf32>
    %128 = vector.broadcast %119 : vector<1x8x1xi32> to vector<1x8x128xi32>
    %129 = arith.cmpi eq, %105, %128 : vector<1x8x128xi32>
    %cst_35 = arith.constant -1.000000e+00 : f32
    %130 = vector.broadcast %cst_35 : f32 to vector<1x8x128xf32>
    %131 = arith.select %129, %130, %110 : vector<1x8x128xi1>, vector<1x8x128xf32>
    %cst_36 = arith.constant dense<0xFF800000> : vector<1x8xf32>
    %132 = vector.multi_reduction <maximumf>, %131, %cst_36 [2] : vector<1x8x128xf32> to vector<1x8xf32>
    %133 = vector.shape_cast %132 : vector<1x8xf32> to vector<1x8x1xf32>
    %134 = vector.broadcast %133 : vector<1x8x1xf32> to vector<1x8x128xf32>
    %135 = arith.cmpf oeq, %131, %134 : vector<1x8x128xf32>
    %c128_i32_37 = arith.constant 128 : i32
    %136 = vector.broadcast %c128_i32_37 : i32 to vector<1x8x128xi32>
    %137 = arith.select %135, %105, %136 : vector<1x8x128xi1>, vector<1x8x128xi32>
    %cst_38 = arith.constant dense<2147483647> : vector<1x8xi32>
    %138 = vector.multi_reduction <minsi>, %137, %cst_38 [2] : vector<1x8x128xi32> to vector<1x8xi32>
    %139 = vector.shape_cast %138 : vector<1x8xi32> to vector<1x8x1xi32>
    %c1_i32_39 = arith.constant 1 : i32
    %140 = vector.broadcast %c1_i32_39 : i32 to vector<1x8x128xi32>
    %141 = arith.cmpi eq, %106, %140 : vector<1x8x128xi32>
    %142 = arith.sitofp %139 : vector<1x8x1xi32> to vector<1x8x1xf32>
    %cst_40 = arith.constant 0.000000e+00 : f32
    %143 = vector.shape_cast %142 : vector<1x8x1xf32> to vector<1x8x1xf32>
    %144 = vector.broadcast %143 : vector<1x8x1xf32> to vector<1x8x128xf32>
    %145 = vector.broadcast %cst_40 : f32 to vector<1x8x128xf32>
    %146 = arith.select %141, %144, %145 : vector<1x8x128xi1>, vector<1x8x128xf32>
    %147 = arith.addf %127, %146 : vector<1x8x128xf32>
    %148 = vector.broadcast %139 : vector<1x8x1xi32> to vector<1x8x128xi32>
    %149 = arith.cmpi eq, %105, %148 : vector<1x8x128xi32>
    %cst_41 = arith.constant -1.000000e+00 : f32
    %150 = vector.broadcast %cst_41 : f32 to vector<1x8x128xf32>
    %151 = arith.select %149, %150, %131 : vector<1x8x128xi1>, vector<1x8x128xf32>
    %cst_42 = arith.constant dense<0xFF800000> : vector<1x8xf32>
    %152 = vector.multi_reduction <maximumf>, %151, %cst_42 [2] : vector<1x8x128xf32> to vector<1x8xf32>
    %153 = vector.shape_cast %152 : vector<1x8xf32> to vector<1x8x1xf32>
    %154 = vector.broadcast %153 : vector<1x8x1xf32> to vector<1x8x128xf32>
    %155 = arith.cmpf oeq, %151, %154 : vector<1x8x128xf32>
    %c128_i32_43 = arith.constant 128 : i32
    %156 = vector.broadcast %c128_i32_43 : i32 to vector<1x8x128xi32>
    %157 = arith.select %155, %105, %156 : vector<1x8x128xi1>, vector<1x8x128xi32>
    %cst_44 = arith.constant dense<2147483647> : vector<1x8xi32>
    %158 = vector.multi_reduction <minsi>, %157, %cst_44 [2] : vector<1x8x128xi32> to vector<1x8xi32>
    %159 = vector.shape_cast %158 : vector<1x8xi32> to vector<1x8x1xi32>
    %c2_i32 = arith.constant 2 : i32
    %160 = vector.broadcast %c2_i32 : i32 to vector<1x8x128xi32>
    %161 = arith.cmpi eq, %106, %160 : vector<1x8x128xi32>
    %162 = arith.sitofp %159 : vector<1x8x1xi32> to vector<1x8x1xf32>
    %cst_45 = arith.constant 0.000000e+00 : f32
    %163 = vector.shape_cast %162 : vector<1x8x1xf32> to vector<1x8x1xf32>
    %164 = vector.broadcast %163 : vector<1x8x1xf32> to vector<1x8x128xf32>
    %165 = vector.broadcast %cst_45 : f32 to vector<1x8x128xf32>
    %166 = arith.select %161, %164, %165 : vector<1x8x128xi1>, vector<1x8x128xf32>
    %167 = arith.addf %147, %166 : vector<1x8x128xf32>
    %168 = vector.broadcast %159 : vector<1x8x1xi32> to vector<1x8x128xi32>
    %169 = arith.cmpi eq, %105, %168 : vector<1x8x128xi32>
    %cst_46 = arith.constant -1.000000e+00 : f32
    %170 = vector.broadcast %cst_46 : f32 to vector<1x8x128xf32>
    %171 = arith.select %169, %170, %151 : vector<1x8x128xi1>, vector<1x8x128xf32>
    %cst_47 = arith.constant dense<0xFF800000> : vector<1x8xf32>
    %172 = vector.multi_reduction <maximumf>, %171, %cst_47 [2] : vector<1x8x128xf32> to vector<1x8xf32>
    %173 = vector.shape_cast %172 : vector<1x8xf32> to vector<1x8x1xf32>
    %174 = vector.broadcast %173 : vector<1x8x1xf32> to vector<1x8x128xf32>
    %175 = arith.cmpf oeq, %171, %174 : vector<1x8x128xf32>
    %c128_i32_48 = arith.constant 128 : i32
    %176 = vector.broadcast %c128_i32_48 : i32 to vector<1x8x128xi32>
    %177 = arith.select %175, %105, %176 : vector<1x8x128xi1>, vector<1x8x128xi32>
    %cst_49 = arith.constant dense<2147483647> : vector<1x8xi32>
    %178 = vector.multi_reduction <minsi>, %177, %cst_49 [2] : vector<1x8x128xi32> to vector<1x8xi32>
    %179 = vector.shape_cast %178 : vector<1x8xi32> to vector<1x8x1xi32>
    %c3_i32 = arith.constant 3 : i32
    %180 = vector.broadcast %c3_i32 : i32 to vector<1x8x128xi32>
    %181 = arith.cmpi eq, %106, %180 : vector<1x8x128xi32>
    %182 = arith.sitofp %179 : vector<1x8x1xi32> to vector<1x8x1xf32>
    %cst_50 = arith.constant 0.000000e+00 : f32
    %183 = vector.shape_cast %182 : vector<1x8x1xf32> to vector<1x8x1xf32>
    %184 = vector.broadcast %183 : vector<1x8x1xf32> to vector<1x8x128xf32>
    %185 = vector.broadcast %cst_50 : f32 to vector<1x8x128xf32>
    %186 = arith.select %181, %184, %185 : vector<1x8x128xi1>, vector<1x8x128xf32>
    %187 = arith.addf %167, %186 : vector<1x8x128xf32>
    %188 = vector.broadcast %179 : vector<1x8x1xi32> to vector<1x8x128xi32>
    %189 = arith.cmpi eq, %105, %188 : vector<1x8x128xi32>
    %cst_51 = arith.constant -1.000000e+00 : f32
    %190 = vector.broadcast %cst_51 : f32 to vector<1x8x128xf32>
    %191 = arith.select %189, %190, %171 : vector<1x8x128xi1>, vector<1x8x128xf32>
    %cst_52 = arith.constant dense<0xFF800000> : vector<1x8xf32>
    %192 = vector.multi_reduction <maximumf>, %191, %cst_52 [2] : vector<1x8x128xf32> to vector<1x8xf32>
    %193 = vector.shape_cast %192 : vector<1x8xf32> to vector<1x8x1xf32>
    %194 = vector.broadcast %193 : vector<1x8x1xf32> to vector<1x8x128xf32>
    %195 = arith.cmpf oeq, %191, %194 : vector<1x8x128xf32>
    %c128_i32_53 = arith.constant 128 : i32
    %196 = vector.broadcast %c128_i32_53 : i32 to vector<1x8x128xi32>
    %197 = arith.select %195, %105, %196 : vector<1x8x128xi1>, vector<1x8x128xi32>
    %cst_54 = arith.constant dense<2147483647> : vector<1x8xi32>
    %198 = vector.multi_reduction <minsi>, %197, %cst_54 [2] : vector<1x8x128xi32> to vector<1x8xi32>
    %199 = vector.shape_cast %198 : vector<1x8xi32> to vector<1x8x1xi32>
    %c4_i32 = arith.constant 4 : i32
    %200 = vector.broadcast %c4_i32 : i32 to vector<1x8x128xi32>
    %201 = arith.cmpi eq, %106, %200 : vector<1x8x128xi32>
    %202 = arith.sitofp %199 : vector<1x8x1xi32> to vector<1x8x1xf32>
    %cst_55 = arith.constant 0.000000e+00 : f32
    %203 = vector.shape_cast %202 : vector<1x8x1xf32> to vector<1x8x1xf32>
    %204 = vector.broadcast %203 : vector<1x8x1xf32> to vector<1x8x128xf32>
    %205 = vector.broadcast %cst_55 : f32 to vector<1x8x128xf32>
    %206 = arith.select %201, %204, %205 : vector<1x8x128xi1>, vector<1x8x128xf32>
    %207 = arith.addf %187, %206 : vector<1x8x128xf32>
    %208 = vector.broadcast %199 : vector<1x8x1xi32> to vector<1x8x128xi32>
    %209 = arith.cmpi eq, %105, %208 : vector<1x8x128xi32>
    %cst_56 = arith.constant -1.000000e+00 : f32
    %210 = vector.broadcast %cst_56 : f32 to vector<1x8x128xf32>
    %211 = arith.select %209, %210, %191 : vector<1x8x128xi1>, vector<1x8x128xf32>
    %cst_57 = arith.constant dense<0xFF800000> : vector<1x8xf32>
    %212 = vector.multi_reduction <maximumf>, %211, %cst_57 [2] : vector<1x8x128xf32> to vector<1x8xf32>
    %213 = vector.shape_cast %212 : vector<1x8xf32> to vector<1x8x1xf32>
    %214 = vector.broadcast %213 : vector<1x8x1xf32> to vector<1x8x128xf32>
    %215 = arith.cmpf oeq, %211, %214 : vector<1x8x128xf32>
    %c128_i32_58 = arith.constant 128 : i32
    %216 = vector.broadcast %c128_i32_58 : i32 to vector<1x8x128xi32>
    %217 = arith.select %215, %105, %216 : vector<1x8x128xi1>, vector<1x8x128xi32>
    %cst_59 = arith.constant dense<2147483647> : vector<1x8xi32>
    %218 = vector.multi_reduction <minsi>, %217, %cst_59 [2] : vector<1x8x128xi32> to vector<1x8xi32>
    %219 = vector.shape_cast %218 : vector<1x8xi32> to vector<1x8x1xi32>
    %c5_i32 = arith.constant 5 : i32
    %220 = vector.broadcast %c5_i32 : i32 to vector<1x8x128xi32>
    %221 = arith.cmpi eq, %106, %220 : vector<1x8x128xi32>
    %222 = arith.sitofp %219 : vector<1x8x1xi32> to vector<1x8x1xf32>
    %cst_60 = arith.constant 0.000000e+00 : f32
    %223 = vector.shape_cast %222 : vector<1x8x1xf32> to vector<1x8x1xf32>
    %224 = vector.broadcast %223 : vector<1x8x1xf32> to vector<1x8x128xf32>
    %225 = vector.broadcast %cst_60 : f32 to vector<1x8x128xf32>
    %226 = arith.select %221, %224, %225 : vector<1x8x128xi1>, vector<1x8x128xf32>
    %227 = arith.addf %207, %226 : vector<1x8x128xf32>
    %c0_61 = arith.constant 0 : index
    %c0_62 = arith.constant 0 : index
    %c0_63 = arith.constant 0 : index
    %228 = vector.load %arg5[%c0_61, %c0_62, %c0_63] : memref<1x8x128xf32, #tpu.memory_space<vmem>>, vector<1x8x128xf32>
    tpu.vector_store %arg5[%c0_61, %c0_62, %c0_63], %227 {strides = array<i32>} : memref<1x8x128xf32, #tpu.memory_space<vmem>>, vector<1x8x128xf32>,
    %229 = vector.broadcast %119 : vector<1x8x1xi32> to vector<1x8x128xi32>
    %230 = arith.cmpi eq, %105, %229 : vector<1x8x128xi32>
    %231 = vector.broadcast %9 : vector<1x8x1xi1> to vector<1x8x128xi1>
    %232 = arith.andi %230, %231 : vector<1x8x128xi1>
    %c1_i32_64 = arith.constant 1 : i32
    %c0_i32_65 = arith.constant 0 : i32
    %233 = vector.broadcast %c1_i32_64 : i32 to vector<1x8x128xi32>
    %234 = vector.broadcast %c0_i32_65 : i32 to vector<1x8x128xi32>
    %235 = arith.select %232, %233, %234 : vector<1x8x128xi1>, vector<1x8x128xi32>
    %cst_66 = arith.constant dense<-2147483648> : vector<1x128xi32>
    %236 = vector.multi_reduction <maxsi>, %235, %cst_66 [1] : vector<1x8x128xi32> to vector<1x128xi32>
    %237 = vector.shape_cast %236 : vector<1x128xi32> to vector<1x1x128xi32>
    %c0_i32_67 = arith.constant 0 : i32
    %238 = vector.broadcast %c0_i32_67 : i32 to vector<1x1x128xi32>
    %239 = arith.cmpi sgt, %237, %238 : vector<1x1x128xi32>
    %c1_i32_68 = arith.constant 1 : i32
    %240 = vector.broadcast %c1_i32_68 : i32 to vector<1x1x128xi32>
    %241 = arith.select %239, %240, %104 : vector<1x1x128xi1>, vector<1x1x128xi32>
    %242 = tpu.iota {dimensions = array<i32: 1>} : vector<1x8x128xi32>
    %c0_i32_69 = arith.constant 0 : i32
    %243 = vector.broadcast %c0_i32_69 : i32 to vector<1x8x128xi32>
    %244 = arith.cmpi eq, %242, %243 : vector<1x8x128xi32>
    %245 = arith.sitofp %99 : vector<1x1x128xi32> to vector<1x1x128xf32>
    %cst_70 = arith.constant 0.000000e+00 : f32
    %246 = vector.shape_cast %245 : vector<1x1x128xf32> to vector<1x1x128xf32>
    %247 = vector.broadcast %246 : vector<1x1x128xf32> to vector<1x8x128xf32>
    %248 = vector.broadcast %cst_70 : f32 to vector<1x8x128xf32>
    %249 = arith.select %244, %247, %248 : vector<1x8x128xi1>, vector<1x8x128xf32>
    %c1_i32_71 = arith.constant 1 : i32
    %250 = vector.broadcast %c1_i32_71 : i32 to vector<1x8x128xi32>
    %251 = arith.cmpi eq, %242, %250 : vector<1x8x128xi32>
    %cst_72 = arith.constant 0.000000e+00 : f32
    %252 = vector.shape_cast %92 : vector<1x1x128xf32> to vector<1x1x128xf32>
    %253 = vector.broadcast %252 : vector<1x1x128xf32> to vector<1x8x128xf32>
    %254 = vector.broadcast %cst_72 : f32 to vector<1x8x128xf32>
    %255 = arith.select %251, %253, %254 : vector<1x8x128xi1>, vector<1x8x128xf32>
    %256 = arith.addf %249, %255 : vector<1x8x128xf32>
    %c2_i32_73 = arith.constant 2 : i32
    %257 = vector.broadcast %c2_i32_73 : i32 to vector<1x8x128xi32>
    %258 = arith.cmpi eq, %242, %257 : vector<1x8x128xi32>
    %259 = arith.sitofp %241 : vector<1x1x128xi32> to vector<1x1x128xf32>
    %cst_74 = arith.constant 0.000000e+00 : f32
    %260 = vector.shape_cast %259 : vector<1x1x128xf32> to vector<1x1x128xf32>
    %261 = vector.broadcast %260 : vector<1x1x128xf32> to vector<1x8x128xf32>
    %262 = vector.broadcast %cst_74 : f32 to vector<1x8x128xf32>
    %263 = arith.select %258, %261, %262 : vector<1x8x128xi1>, vector<1x8x128xf32>
    %264 = arith.addf %256, %263 : vector<1x8x128xf32>
    %c0_75 = arith.constant 0 : index
    %c0_76 = arith.constant 0 : index
    %c0_77 = arith.constant 0 : index
    %265 = vector.load %arg4[%c0_75, %c0_76, %c0_77] : memref<1x8x128xf32, #tpu.memory_space<vmem>>, vector<1x8x128xf32>
    tpu.vector_store %arg4[%c0_75, %c0_76, %c0_77], %264 {strides = array<i32>} : memref<1x8x128xf32, #tpu.memory_space<vmem>>, vector<1x8x128xf32>,
    return
  }
  func.func @transform_0(%arg0: i32) -> (i32, i32, i32) {
    %c0_i32 = arith.constant 0 : i32
    %c0_i32_0 = arith.constant 0 : i32
    %c0_i32_1 = arith.constant 0 : i32
    return %arg0, %c0_i32, %c0_i32_0 : i32, i32, i32
  }
  func.func @transform_1(%arg0: i32) -> (i32, i32, i32) {
    %c0_i32 = arith.constant 0 : i32
    %c0_i32_0 = arith.constant 0 : i32
    %c0_i32_1 = arith.constant 0 : i32
    return %arg0, %c0_i32, %c0_i32_0 : i32, i32, i32
  }
  func.func @transform_2(%arg0: i32) -> (i32, i32, i32) {
    %c0_i32 = arith.constant 0 : i32
    %c0_i32_0 = arith.constant 0 : i32
    %c0_i32_1 = arith.constant 0 : i32
    return %arg0, %c0_i32, %c0_i32_0 : i32, i32, i32
  }
  func.func @transform_3(%arg0: i32) -> (i32, i32, i32) {
    %c0_i32 = arith.constant 0 : i32
    %c0_i32_0 = arith.constant 0 : i32
    %c0_i32_1 = arith.constant 0 : i32
    return %arg0, %c0_i32, %c0_i32_0 : i32, i32, i32
  }
  func.func @transform_4(%arg0: i32) -> (i32, i32, i32) {
    %c0_i32 = arith.constant 0 : i32
    %c0_i32_0 = arith.constant 0 : i32
    %c0_i32_1 = arith.constant 0 : i32
    return %arg0, %c0_i32, %c0_i32_0 : i32, i32, i32
  }
}

</mosaic_0001>

<llo_original>
// kernel: _pack_and_match.1
$region0: #{_pack_and_match.1}
  #allocation0 [shape = 'u32[]', space=smem, size = 0x4, offset = 0x4, fixed_abs, tag = 'smem constant byte address 0x4 - core index']
  #allocation1 [shape = 'u32[144,128]{1,0:T(1,128)}', space=vmem, size = 0x12000, scoped, tag = 'internal scratch']
  %s0 = inlined_call_operand.vmem [shape: f32[2,8,128], index: 0, kind: input, shape index: {}]
  %s1 = inlined_call_operand.vmem [shape: f32[2,8,128], index: 1, kind: input, shape index: {}]
  %s2 = inlined_call_operand.vmem [shape: f32[2,8,8], index: 2, kind: input, shape index: {}]
  %s3 = inlined_call_operand.hbm [shape: f32[2,8,128], index: 3, kind: output, shape index: {0}]
  %s4 = inlined_call_operand.hbm [shape: f32[2,8,128], index: 4, kind: output, shape index: {1}]
  %5 = xla_tuple %s3, %s4
  %s6 = sld [smem:[#allocation0]]
  $region53: #{_pack_and_match.1} parent=0
    _
  %s8 = ssub.s32 1, %s6
  %s9 = scalar_select 0, %s8, %s6
  $region1: #{_pack_and_match.1} parent=0
    #allocation2 [shape = 'u8[8192]{0}', space=vmem, size = 0x2000, scoped, tag = 'output window, operand 0']
    #allocation3 [shape = 's32[2]{0}', space=sflag, size = 0x8, scoped, tag = 'scoped memory for _pack_and_match.1']
    #allocation4 [shape = 'u8[8192]{0}', space=vmem, size = 0x2000, scoped, tag = 'output window, operand 1']
    #allocation5 [shape = 's32[2]{0}', space=sflag, size = 0x8, scoped, tag = 'scoped memory for _pack_and_match.1']
    %10 = vsyncpa [#allocation3], 0
    %s11 = scalar_lea.sflag [#allocation3], 1
    %12 = vsyncpa %s11, 0
    %13 = vsyncpa [#allocation5], 0
    %s14 = scalar_lea.sflag [#allocation5], 1
    %15 = vsyncpa %s14, 0
    loop: start=0, step=1, limit=4
    $region2: #{_pack_and_match.1} parent=1 // loop_pre_header
      _
    $region3: #{_pack_and_match.1} parent=1 // loop_header
      %s17 = sphi 0, %s21
      %p18 = scmp.ge.s32.totalorder %s17, 4
      %s27 = sphi 0, %s29
      %s30 = sphi 0, %s27
      %s31 = sphi 0, %s30
      %s47 = sphi 0, %s31
      %s53 = sphi 0, %s55
      %s56 = sphi 0, %s53
      %s57 = sphi 0, %s56
      %s73 = sphi 0, %s57
      %s79 = sphi 0, %s81
      %s82 = sphi 0, %s79
      %s83 = sphi 0, %s82
      %s99 = sphi 0, %s83
      %s105 = sphi 0, %s107
      %s108 = sphi 0, %s105
      %s109 = sphi 0, %s108
      %s125 = sphi 0, %s109
      %s131 = sphi 0, %s133
      %s134 = sphi 0, %s131
      %s135 = sphi 0, %s134
      %s151 = sphi 0, %s135
    $region4: #{_pack_and_match.1} parent=1 // loop_header_branch
      %20 = sbr.rel (%p18) target = $region8
    $region5: #{_pack_and_match.1} parent=1 // loop_body
      %s22 = ssub.s32 %s17, 1
      %s23 = ssub.s32 %s17, 2
      %s24 = sadd.s32 %s17, 1
      %s25 = ssub.s32 %s17, %s24
      %p26 = scmp.eq.s32.totalorder %s25, 0
      %s28 = sadd.s32 %s27, 1
      %s29 = scalar_select %p26, %s27, %s28
      %p32 = pneg %p26
      %p33 = scmp.eq.s32.totalorder %s17, 1
      %p34 = por %p32, %p33
      %p35 = scmp.ne.s32.totalorder %s27, %s30
      %p36 = scmp.eq.s32.totalorder %s17, 0
      %p37 = por %p35, %p36
      %p38 = scmp.ne.s32.totalorder %s27, %s30
      %p39 = scmp.eq.s32.totalorder %s22, 1
      %p40 = por %p38, %p39
      %p41 = scmp.ne.s32.totalorder %s30, %s31
      %p42 = scmp.eq.s32.totalorder %s22, 0
      %p43 = por %p41, %p42
      %p44 = scmp.ne.s32.totalorder %s30, %s31
      %p45 = scmp.eq.s32.totalorder %s23, 1
      %p46 = por %p44, %p45
      %p48 = scmp.ne.s32.totalorder %s31, %s47
      %p49 = scmp.eq.s32.totalorder %s23, 0
      %p50 = por %p48, %p49
      %s51 = ssub.s32 %s17, %s24
      %p52 = scmp.eq.s32.totalorder %s51, 0
      %s54 = sadd.s32 %s53, 1
      %s55 = scalar_select %p52, %s53, %s54
      %p58 = pneg %p52
      %p59 = scmp.eq.s32.totalorder %s17, 1
      %p60 = por %p58, %p59
      %p61 = scmp.ne.s32.totalorder %s53, %s56
      %p62 = scmp.eq.s32.totalorder %s17, 0
      %p63 = por %p61, %p62
      %p64 = scmp.ne.s32.totalorder %s53, %s56
      %p65 = scmp.eq.s32.totalorder %s22, 1
      %p66 = por %p64, %p65
      %p67 = scmp.ne.s32.totalorder %s56, %s57
      %p68 = scmp.eq.s32.totalorder %s22, 0
      %p69 = por %p67, %p68
      %p70 = scmp.ne.s32.totalorder %s56, %s57
      %p71 = scmp.eq.s32.totalorder %s23, 1
      %p72 = por %p70, %p71
      %p74 = scmp.ne.s32.totalorder %s57, %s73
      %p75 = scmp.eq.s32.totalorder %s23, 0
      %p76 = por %p74, %p75
      %s77 = ssub.s32 %s17, %s24
      %p78 = scmp.eq.s32.totalorder %s77, 0
      %s80 = sadd.s32 %s79, 1
      %s81 = scalar_select %p78, %s79, %s80
      %p84 = pneg %p78
      %p85 = scmp.eq.s32.totalorder %s17, 1
      %p86 = por %p84, %p85
      %p87 = scmp.ne.s32.totalorder %s79, %s82
      %p88 = scmp.eq.s32.totalorder %s17, 0
      %p89 = por %p87, %p88
      %p90 = scmp.ne.s32.totalorder %s79, %s82
      %p91 = scmp.eq.s32.totalorder %s22, 1
      %p92 = por %p90, %p91
      %p93 = scmp.ne.s32.totalorder %s82, %s83
      %p94 = scmp.eq.s32.totalorder %s22, 0
      %p95 = por %p93, %p94
      %p96 = scmp.ne.s32.totalorder %s82, %s83
      %p97 = scmp.eq.s32.totalorder %s23, 1
      %p98 = por %p96, %p97
      %p100 = scmp.ne.s32.totalorder %s83, %s99
      %p101 = scmp.eq.s32.totalorder %s23, 0
      %p102 = por %p100, %p101
      %s103 = ssub.s32 %s17, %s24
      %p104 = scmp.eq.s32.totalorder %s103, 0
      %s106 = sadd.s32 %s105, 1
      %s107 = scalar_select %p104, %s105, %s106
      %p110 = pneg %p104
      %p111 = scmp.eq.s32.totalorder %s17, 1
      %p112 = por %p110, %p111
      %p113 = scmp.ne.s32.totalorder %s105, %s108
      %p114 = scmp.eq.s32.totalorder %s17, 0
      %p115 = por %p113, %p114
      %p116 = scmp.ne.s32.totalorder %s105, %s108
      %p117 = scmp.eq.s32.totalorder %s22, 1
      %p118 = por %p116, %p117
      %p119 = scmp.ne.s32.totalorder %s108, %s109
      %p120 = scmp.eq.s32.totalorder %s22, 0
      %p121 = por %p119, %p120
      %p122 = scmp.ne.s32.totalorder %s108, %s109
      %p123 = scmp.eq.s32.totalorder %s23, 1
      %p124 = por %p122, %p123
      %p126 = scmp.ne.s32.totalorder %s109, %s125
      %p127 = scmp.eq.s32.totalorder %s23, 0
      %p128 = por %p126, %p127
      %s129 = ssub.s32 %s17, %s24
      %p130 = scmp.eq.s32.totalorder %s129, 0
      %s132 = sadd.s32 %s131, 1
      %s133 = scalar_select %p130, %s131, %s132
      %p136 = pneg %p130
      %p137 = scmp.eq.s32.totalorder %s17, 1
      %p138 = por %p136, %p137
      %p139 = scmp.ne.s32.totalorder %s131, %s134
      %p140 = scmp.eq.s32.totalorder %s17, 0
      %p141 = por %p139, %p140
      %p142 = scmp.ne.s32.totalorder %s131, %s134
      %p143 = scmp.eq.s32.totalorder %s22, 1
      %p144 = por %p142, %p143
      %p145 = scmp.ne.s32.totalorder %s134, %s135
      %p146 = scmp.eq.s32.totalorder %s22, 0
      %p147 = por %p145, %p146
      %p148 = scmp.ne.s32.totalorder %s134, %s135
      %p149 = scmp.eq.s32.totalorder %s23, 1
      %p150 = por %p148, %p149
      %p152 = scmp.ne.s32.totalorder %s135, %s151
      %p153 = scmp.eq.s32.totalorder %s23, 0
      %p154 = por %p152, %p153
      %p155 = scmp.le.s32.totalorder 1, %s17
      %p156 = scmp.lt.s32.totalorder %s17, 3
      %p157 = pnand %p155, %p156
      %p158 = pneg %p157
      // Predicated region
      $region9: #{_pack_and_match.1} parent=5 // pred_check
        _
      $region10: #{_pack_and_match.1} parent=5 // pred_check_branch
        %160 = sbr.rel (%p157) target = $region12
      $region11: #{_pack_and_match.1} parent=5 // pred_region
        %s161 = ssub.s32 %s17, 1
      $region12: #{_pack_and_match.1} parent=5 // pred_fallthru
        _
      %p162 = scmp.lt.s32.totalorder %s17, 2
      // Predicated region
      $region13: #{_pack_and_match.1} parent=5 // pred_check
        %p163 = pneg %p162
      $region14: #{_pack_and_match.1} parent=5 // pred_check_branch
        %165 = sbr.rel (%p163) target = $region16
      $region15: #{_pack_and_match.1} parent=5 // pred_region
        // Predicated region
        $region17: #{_pack_and_match.1} parent=15 // pred_check
          %p166 = pneg %p37
        $region18: #{_pack_and_match.1} parent=15 // pred_check_branch
          %168 = sbr.rel (%p166) target = $region20
        $region19: #{_pack_and_match.1} parent=15 // pred_region
          %p169 = scmp.lt.s32.totalorder %s17, 1
          %s170 = scalar_select %p169, %s17, 1
          %s171 = smul.addr %s170, 8
          %s172 = scalar_lea.vmem %s0, %s171
        $region20: #{_pack_and_match.1} parent=15 // pred_fallthru
          _
        // Predicated region
        $region21: #{_pack_and_match.1} parent=15 // pred_check
          %p173 = pneg %p63
        $region22: #{_pack_and_match.1} parent=15 // pred_check_branch
          %175 = sbr.rel (%p173) target = $region24
        $region23: #{_pack_and_match.1} parent=15 // pred_region
          %p176 = scmp.lt.s32.totalorder %s17, 1
          %s177 = scalar_select %p176, %s17, 1
          %s178 = smul.addr %s177, 8
          %s179 = scalar_lea.vmem %s1, %s178
        $region24: #{_pack_and_match.1} parent=15 // pred_fallthru
          _
        // Predicated region
        $region25: #{_pack_and_match.1} parent=15 // pred_check
          %p180 = pneg %p89
        $region26: #{_pack_and_match.1} parent=15 // pred_check_branch
          %182 = sbr.rel (%p180) target = $region28
        $region27: #{_pack_and_match.1} parent=15 // pred_region
          %p183 = scmp.lt.s32.totalorder %s17, 1
          %s184 = scalar_select %p183, %s17, 1
          %s185 = smul.addr %s184, 8
          %s186 = scalar_lea.vmem %s2, %s185
        $region28: #{_pack_and_match.1} parent=15 // pred_fallthru
          _
      $region16: #{_pack_and_match.1} parent=5 // pred_fallthru
        _
      %p187 = scmp.le.s32.totalorder 1, %s17
      %p188 = scmp.lt.s32.totalorder %s17, 3
      %p189 = pnand %p187, %p188
      %p190 = pneg %p189
      // Predicated region
      $region29: #{_pack_and_match.1} parent=5 // pred_check
        _
      $region30: #{_pack_and_match.1} parent=5 // pred_check_branch
        %192 = sbr.rel (%p189) target = $region32
      $region31: #{_pack_and_match.1} parent=5 // pred_region
        %s193 = ssub.s32 %s17, 1
        %p194 = scmp.lt.s32.totalorder %s22, 1
        %s195 = scalar_select %p194, %s22, 1
        %s196 = smul.addr %s195, 8
        %s197 = scalar_lea.vmem %s0, %s196
        %p198 = pneg %p43
        %p199 = pneg %p40
        %p200 = scmp.lt.s32.totalorder %s22, 1
        %s201 = scalar_select %p200, %s22, 1
        %s202 = smul.addr %s201, 8
        %s203 = scalar_lea.vmem %s1, %s202
        %p204 = pneg %p69
        %p205 = pneg %p66
        %p206 = scmp.lt.s32.totalorder %s22, 1
        %s207 = scalar_select %p206, %s22, 1
        %s208 = smul.addr %s207, 8
        %s209 = scalar_lea.vmem %s2, %s208
        %p210 = pneg %p95
        %p211 = pneg %p92
        %p212 = pneg %p121
        %p213 = pneg %p118
        %s214 = sand.u32 %s108, 1
        %s215 = scalar_lea.sflag [#allocation3], %s214
        %s216 = sand.u32 %s108, 1
        %s217 = smul.addr %s216, 8
        %s218 = scalar_lea.vmem [#allocation2], %s217
        %p219 = pneg %p147
        %p220 = pneg %p144
        %s221 = sand.u32 %s134, 1
        %s222 = scalar_lea.sflag [#allocation5], %s221
        %s223 = sand.u32 %s134, 1
        %s224 = smul.addr %s223, 8
        %s225 = scalar_lea.vmem [#allocation4], %s224
        %p226 = scmp.lt.s32.totalorder %s22, 1
        %s227 = scalar_select %p226, %s22, 1
        %s228 = smul.addr %s227, 8
        %s229 = scalar_lea.vmem %s0, %s228
        %p230 = scmp.lt.s32.totalorder %s22, 1
        %s231 = scalar_select %p230, %s22, 1
        %s232 = smul.addr %s231, 8
        %s233 = scalar_lea.vmem %s1, %s232
        %p234 = scmp.lt.s32.totalorder %s22, 1
        %s235 = scalar_select %p234, %s22, 1
        %s236 = smul.addr %s235, 8
        %s237 = scalar_lea.vmem %s2, %s236
        %v238 = vld [vmem:[%s229] sm:$0xff]
        %v239 = vld [vmem:[%s233] sm:$0xff]
        %v240 = vld [vmem:[%s237] sm:$0xff]
        %vm241 = vcmp.gt.f32.partialorder %v240, 0.0
        %vm242 = vcmp.gt.f32.partialorder %v239, 0.0
        %v243 = vmul.f32 %v239, 0.5
        %v245 = vrot.slane %v243, 2
        %v247 = vsub.f32 %v239, %v245
        %v248 = vadd.f32 %v239, %v245
        %v249 = vmul.f32 %v240, 0.5
        %251 = vrot.lane.b32.xlu0 %v249, 126
        %v252 = vpop.permute.xlu0 %251
        %v254 = vsub.f32 %v240, %v252
        %v255 = vadd.f32 %v240, %v252
        %v256 = vlaneseq
        %v257 = vshrl.u32 %v256, 7
        %v258 = vsub.s32 0, %v257
        %v259 = vrot.slane %v248, %v258
        %261 = vset.pattern.permute.xlu0 0
        %262 = vperm.xlu0 %261, %v255
        %v263 = vpop.permute.xlu0 %262
        %v265 = vmin.f32 %v259, %v263
        %v266 = vlaneseq
        %v267 = vshrl.u32 %v266, 7
        %v268 = vsub.s32 0, %v267
        %v269 = vrot.slane %v247, %v268
        %271 = vset.pattern.permute.xlu0 0
        %272 = vperm.xlu0 %271, %v254
        %v273 = vpop.permute.xlu0 %272
        %v275 = vmax.f32 %v269, %v273
        %v276 = vsub.f32 %v265, %v275
        %v277 = vmax.f32 %v276, 0.0
        %v278 = vlaneseq
        %v279 = vshrl.u32 %v278, 7
        %v280 = vsub.s32 1, %v279
        %v281 = vrot.slane %v248, %v280
        %282 = vset.pattern.permute.xlu0 1
        %283 = vperm.xlu0 %282, %v255
        %v284 = vpop.permute.xlu0 %283
        %v286 = vmin.f32 %v281, %v284
        %v287 = vlaneseq
        %v288 = vshrl.u32 %v287, 7
        %v289 = vsub.s32 1, %v288
        %v290 = vrot.slane %v247, %v289
        %291 = vset.pattern.permute.xlu0 1
        %292 = vperm.xlu0 %291, %v254
        %v293 = vpop.permute.xlu0 %292
        %v295 = vmax.f32 %v290, %v293
        %v296 = vsub.f32 %v286, %v295
        %v297 = vmax.f32 %v296, 0.0
        %v298 = vmul.f32 %v277, %v297
        %v299 = vsub.f32 %v248, %v247
        %v301 = vrot.slane %v299, 1
        %v303 = vmul.f32 %v299, %v301
        %v304 = vsub.f32 %v255, %v254
        %306 = vrot.lane.b32.xlu0 %v304, 127
        %v307 = vpop.permute.xlu0 %306
        %v309 = vmul.f32 %v304, %v307
        %v310 = vlaneseq
        %v311 = vshrl.u32 %v310, 7
        %v312 = vsub.s32 0, %v311
        %v313 = vrot.slane %v303, %v312
        %315 = vset.pattern.permute.xlu0 0
        %316 = vperm.xlu0 %315, %v309
        %v317 = vpop.permute.xlu0 %316
        %v319 = vadd.f32 %v313, %v317
        %v320 = vsub.f32 %v319, %v298
        %vm321 = vcmp.gt.f32.partialorder %v320, 0.0
        %v322 = vsel %vm321, %v320, 1.0
        %v323 = vrcp.pop %v322
        %v324 = vmul.f32 %v298, %v323
        %v325 = vsel %vm321, %v324, 0.0
        %v326 = vmul.f32 %v325, 0.8
        %v327 = vxor.u32 %v238, 2147483648
        %v328 = vmul.f32 %v327, 1.442695
        %v329 = vpow.pop %v328
        %v330 = vadd.f32 %v329, 1.0
        %v331 = vrcp.pop %v330
        %v332 = vmul.f32 1.0, %v331
        %v333 = vmul.f32 %v332, 0.2
        %v334 = vadd.f32 %v326, %v333
        %v335 = vsel %vm241, 1, 0
        %336 = vset.pattern.permute.xlu0 4
        %337 = vperm.xlu0 %336, %v335
        %v338 = vpop.permute.xlu0 %337
        %vm339 = vcmp.eq.s32.totalorder %v338, 1
        %v340 = vsel %vm339, %v334, -1.0
        %v341 = vrot.slane %v340, 4
        %v342 = vmax.f32 %v340, %v341
        %v343 = vrot.slane %v342, 2
        %v344 = vmax.f32 %v342, %v343
        %v345 = vrot.slane %v344, 1
        %v346 = vmax.f32 %v344, %v345
        %v347 = vlaneseq
        %v348 = vshrl.u32 %v347, 7
        %vm349 = vcmp.eq.f32.partialorder %v340, %v346
        %v350 = vsel %vm349, %v348, 8
        %v351 = vrot.slane %v350, 4
        %vm352 = vcmp.lt.s32.totalorder %v350, %v351
        %v353 = vsel %vm352, %v350, %v351
        %v354 = vrot.slane %v353, 2
        %vm355 = vcmp.lt.s32.totalorder %v353, %v354
        %v356 = vsel %vm355, %v353, %v354
        %v357 = vrot.slane %v356, 1
        %vm358 = vcmp.lt.s32.totalorder %v356, %v357
        %v359 = vsel %vm358, %v356, %v357
        %vm360 = vcmp.lt.f32.partialorder %v346, 0.4
        %v361 = vsel %vm360, 0, 1
        %v362 = vlaneseq
        %v363 = vand.u32 %v362, 127
        %v364 = vsel %vm242, 1, 0
        %v365 = vlaneseq
        %v366 = vshrl.u32 %v365, 7
        %v367 = vsub.s32 4, %v366
        %v368 = vrot.slane %v364, %v367
        %vm369 = vcmp.eq.s32.totalorder %v368, 1
        %v370 = vsel %vm369, %v334, -1.0
        %371 = vmax.xlane.f32.xlu0 %v370
        %v372 = vpop.xlane.xlu0 %371
        %vm373 = vcmp.eq.f32.partialorder %v370, %v372
        %v374 = vsel %vm373, %v363, 128
        %v375 = vand.u32 %v374, 65535
        %v376 = vshra.s32 %v374, 16
        %v377 = vcvt.s32.f32 %v375
        %v378 = vcvt.s32.f32 %v376
        %379 = vmin.xlane.f32.xlu0 %v378
        %v380 = vpop.xlane.xlu0 %379
        %vm381 = vcmp.eq.f32.partialorder %v378, %v380
        %v382 = vsel %vm381, %v377, inf
        %383 = vmin.xlane.f32.xlu0 %v382
        %v384 = vpop.xlane.xlu0 %383
        %v385 = vcvt.f32.s32 %v384
        %v386 = vcvt.f32.s32 %v380
        %v387 = vshll.u32 %v386, 16
        %v388 = vadd.s32 %v387, %v385
        %vm389 = vcmp.eq.s32.totalorder %v363, 0
        %v390 = vcvt.s32.f32 %v388
        %v391 = vsel %vm389, %v390, 0.0
        %v392 = vadd.f32 %v391, 0.0
        %vm393 = vcmp.eq.s32.totalorder %v363, %v388
        %v394 = vsel %vm393, -1.0, %v370
        %395 = vmax.xlane.f32.xlu0 %v394
        %v396 = vpop.xlane.xlu0 %395
        %vm397 = vcmp.eq.f32.partialorder %v394, %v396
        %v398 = vsel %vm397, %v363, 128
        %v399 = vand.u32 %v398, 65535
        %v400 = vshra.s32 %v398, 16
        %v401 = vcvt.s32.f32 %v399
        %v402 = vcvt.s32.f32 %v400
        %403 = vmin.xlane.f32.xlu0 %v402
        %v404 = vpop.xlane.xlu0 %403
        %vm405 = vcmp.eq.f32.partialorder %v402, %v404
        %v406 = vsel %vm405, %v401, inf
        %407 = vmin.xlane.f32.xlu0 %v406
        %v408 = vpop.xlane.xlu0 %407
        %v409 = vcvt.f32.s32 %v408
        %v410 = vcvt.f32.s32 %v404
        %v411 = vshll.u32 %v410, 16
        %v412 = vadd.s32 %v411, %v409
        %vm413 = vcmp.eq.s32.totalorder %v363, 1
        %v414 = vcvt.s32.f32 %v412
        %v415 = vsel %vm413, %v414, 0.0
        %v416 = vadd.f32 %v392, %v415
        %vm417 = vcmp.eq.s32.totalorder %v363, %v412
        %v418 = vsel %vm417, -1.0, %v394
        %419 = vmax.xlane.f32.xlu0 %v418
        %v420 = vpop.xlane.xlu0 %419
        %vm421 = vcmp.eq.f32.partialorder %v418, %v420
        %v422 = vsel %vm421, %v363, 128
        %v423 = vand.u32 %v422, 65535
        %v424 = vshra.s32 %v422, 16
        %v425 = vcvt.s32.f32 %v423
        %v426 = vcvt.s32.f32 %v424
        %427 = vmin.xlane.f32.xlu0 %v426
        %v428 = vpop.xlane.xlu0 %427
        %vm429 = vcmp.eq.f32.partialorder %v426, %v428
        %v430 = vsel %vm429, %v425, inf
        %431 = vmin.xlane.f32.xlu0 %v430
        %v432 = vpop.xlane.xlu0 %431
        %v433 = vcvt.f32.s32 %v432
        %v434 = vcvt.f32.s32 %v428
        %v435 = vshll.u32 %v434, 16
        %v436 = vadd.s32 %v435, %v433
        %vm437 = vcmp.eq.s32.totalorder %v363, 2
        %v438 = vcvt.s32.f32 %v436
        %v439 = vsel %vm437, %v438, 0.0
        %v440 = vadd.f32 %v416, %v439
        %vm441 = vcmp.eq.s32.totalorder %v363, %v436
        %v442 = vsel %vm441, -1.0, %v418
        %443 = vmax.xlane.f32.xlu0 %v442
        %v444 = vpop.xlane.xlu0 %443
        %vm445 = vcmp.eq.f32.partialorder %v442, %v444
        %v446 = vsel %vm445, %v363, 128
        %v447 = vand.u32 %v446, 65535
        %v448 = vshra.s32 %v446, 16
        %v449 = vcvt.s32.f32 %v447
        %v450 = vcvt.s32.f32 %v448
        %451 = vmin.xlane.f32.xlu0 %v450
        %v452 = vpop.xlane.xlu0 %451
        %vm453 = vcmp.eq.f32.partialorder %v450, %v452
        %v454 = vsel %vm453, %v449, inf
        %455 = vmin.xlane.f32.xlu0 %v454
        %v456 = vpop.xlane.xlu0 %455
        %v457 = vcvt.f32.s32 %v456
        %v458 = vcvt.f32.s32 %v452
        %v459 = vshll.u32 %v458, 16
        %v460 = vadd.s32 %v459, %v457
        %vm461 = vcmp.eq.s32.totalorder %v363, 3
        %v462 = vcvt.s32.f32 %v460
        %v463 = vsel %vm461, %v462, 0.0
        %v464 = vadd.f32 %v440, %v463
        %vm465 = vcmp.eq.s32.totalorder %v363, %v460
        %v466 = vsel %vm465, -1.0, %v442
        %467 = vmax.xlane.f32.xlu0 %v466
        %v468 = vpop.xlane.xlu0 %467
        %vm469 = vcmp.eq.f32.partialorder %v466, %v468
        %v470 = vsel %vm469, %v363, 128
        %v471 = vand.u32 %v470, 65535
        %v472 = vshra.s32 %v470, 16
        %v473 = vcvt.s32.f32 %v471
        %v474 = vcvt.s32.f32 %v472
        %475 = vmin.xlane.f32.xlu0 %v474
        %v476 = vpop.xlane.xlu0 %475
        %vm477 = vcmp.eq.f32.partialorder %v474, %v476
        %v478 = vsel %vm477, %v473, inf
        %479 = vmin.xlane.f32.xlu0 %v478
        %v480 = vpop.xlane.xlu0 %479
        %v481 = vcvt.f32.s32 %v480
        %v482 = vcvt.f32.s32 %v476
        %v483 = vshll.u32 %v482, 16
        %v484 = vadd.s32 %v483, %v481
        %vm485 = vcmp.eq.s32.totalorder %v363, 4
        %v486 = vcvt.s32.f32 %v484
        %v487 = vsel %vm485, %v486, 0.0
        %v488 = vadd.f32 %v464, %v487
        %vm489 = vcmp.eq.s32.totalorder %v363, %v484
        %v490 = vsel %vm489, -1.0, %v466
        %491 = vmax.xlane.f32.xlu0 %v490
        %v492 = vpop.xlane.xlu0 %491
        %vm493 = vcmp.eq.f32.partialorder %v490, %v492
        %v494 = vsel %vm493, %v363, 128
        %v495 = vand.u32 %v494, 65535
        %v496 = vshra.s32 %v494, 16
        %v497 = vcvt.s32.f32 %v495
        %v498 = vcvt.s32.f32 %v496
        %499 = vmin.xlane.f32.xlu0 %v498
        %v500 = vpop.xlane.xlu0 %499
        %vm501 = vcmp.eq.f32.partialorder %v498, %v500
        %v502 = vsel %vm501, %v497, inf
        %503 = vmin.xlane.f32.xlu0 %v502
        %v504 = vpop.xlane.xlu0 %503
        %v505 = vcvt.f32.s32 %v504
        %v506 = vcvt.f32.s32 %v500
        %v507 = vshll.u32 %v506, 16
        %v508 = vadd.s32 %v507, %v505
        %vm509 = vcmp.eq.s32.totalorder %v363, 5
        %v510 = vcvt.s32.f32 %v508
        %v511 = vsel %vm509, %v510, 0.0
        %v512 = vadd.f32 %v488, %v511
        %513 = vst [vmem:[%s225] sm:$0xff] %v512
        %vm514 = vmand %vm393, %vm339
        %v515 = vsel %vm514, 1, 0
        %v516 = vrot.slane %v515, 4
        %vm517 = vcmp.gt.s32.totalorder %v515, %v516
        %v518 = vsel %vm517, %v515, %v516
        %v519 = vrot.slane %v518, 2
        %vm520 = vcmp.gt.s32.totalorder %v518, %v519
        %v521 = vsel %vm520, %v518, %v519
        %v522 = vrot.slane %v521, 1
        %vm523 = vcmp.gt.s32.totalorder %v521, %v522
        %v524 = vsel %vm523, %v521, %v522
        %vm525 = vcmp.gt.s32.totalorder %v524, 0
        %v526 = vsel %vm525, 1, %v361
        %vm527 = vcmp.eq.s32.totalorder %v348, 0
        %v528 = vcvt.s32.f32 %v359
        %v529 = vsel %vm527, %v528, 0.0
        %vm530 = vcmp.eq.s32.totalorder %v348, 1
        %v531 = vsel %vm530, %v346, 0.0
        %v532 = vadd.f32 %v529, %v531
        %vm533 = vcmp.eq.s32.totalorder %v348, 2
        %v534 = vcvt.s32.f32 %v526
        %v535 = vsel %vm533, %v534, 0.0
        %v536 = vadd.f32 %v532, %v535
        %537 = vst [vmem:[%s218] sm:$0xff] %v536
        %s538 = sand.u32 %s108, 1
        %s539 = scalar_lea.sflag [#allocation3], %s538
        %s540 = sand.u32 %s108, 1
        %s541 = smul.addr %s540, 8
        %s542 = scalar_lea.vmem [#allocation2], %s541
        %s543 = sand.u32 %s134, 1
        %s544 = scalar_lea.sflag [#allocation5], %s543
        %s545 = sand.u32 %s134, 1
        %s546 = smul.addr %s545, 8
        %s547 = scalar_lea.vmem [#allocation4], %s546
        // Predicated region
        $region33: #{_pack_and_match.1} parent=31 // pred_check
          %p548 = pneg %p118
        $region34: #{_pack_and_match.1} parent=31 // pred_check_branch
          %550 = sbr.rel (%p548) target = $region36
        $region35: #{_pack_and_match.1} parent=31 // pred_region
          %s552 = ssub.s32 128, 128
          %553 = vsyncadd %s539, %s552
          %s554 = smul.addr %s22, 128
          %s555 = scalar_lea.hbm %s3, %s554
          %s557 = sshll.u32 %s542, 4
          %s558 = int_to_ptr.vmem [resolvable:$true] %s557
          %560 = dma.vmem_to_hbm [thread:$0]  %s558, 128, %s555, %s539
        $region36: #{_pack_and_match.1} parent=31 // pred_fallthru
          _
        // Predicated region
        $region37: #{_pack_and_match.1} parent=31 // pred_check
          %p561 = pneg %p144
        $region38: #{_pack_and_match.1} parent=31 // pred_check_branch
          %563 = sbr.rel (%p561) target = $region40
        $region39: #{_pack_and_match.1} parent=31 // pred_region
          %s565 = ssub.s32 128, 128
          %566 = vsyncadd %s544, %s565
          %s567 = smul.addr %s22, 128
          %s568 = scalar_lea.hbm %s4, %s567
          %s570 = sshll.u32 %s547, 4
          %s571 = int_to_ptr.vmem [resolvable:$true] %s570
          %573 = dma.vmem_to_hbm [thread:$0]  %s571, 128, %s568, %s544
        $region40: #{_pack_and_match.1} parent=31 // pred_fallthru
          _
      $region32: #{_pack_and_match.1} parent=5 // pred_fallthru
        _
      %p574 = scmp.le.s32.totalorder 2, %s17
      // Predicated region
      $region41: #{_pack_and_match.1} parent=5 // pred_check
        %p575 = pneg %p574
      $region42: #{_pack_and_match.1} parent=5 // pred_check_branch
        %577 = sbr.rel (%p575) target = $region44
      $region43: #{_pack_and_match.1} parent=5 // pred_region
        %s578 = ssub.s32 %s17, 2
        // Predicated region
        $region45: #{_pack_and_match.1} parent=43 // pred_check
          %p579 = pneg %p124
        $region46: #{_pack_and_match.1} parent=43 // pred_check_branch
          %581 = sbr.rel (%p579) target = $region48
        $region47: #{_pack_and_match.1} parent=43 // pred_region
          %s582 = sand.u32 %s109, 1
          %s583 = scalar_lea.sflag [#allocation3], %s582
          %s584 = sand.u32 %s109, 1
          %s585 = smul.addr %s584, 8
          %s586 = scalar_lea.vmem [#allocation2], %s585
          %587 = dma.done %s583, 128
        $region48: #{_pack_and_match.1} parent=43 // pred_fallthru
          _
        // Predicated region
        $region49: #{_pack_and_match.1} parent=43 // pred_check
          %p588 = pneg %p150
        $region50: #{_pack_and_match.1} parent=43 // pred_check_branch
          %590 = sbr.rel (%p588) target = $region52
        $region51: #{_pack_and_match.1} parent=43 // pred_region
          %s591 = sand.u32 %s135, 1
          %s592 = scalar_lea.sflag [#allocation5], %s591
          %s593 = sand.u32 %s135, 1
          %s594 = smul.addr %s593, 8
          %s595 = scalar_lea.vmem [#allocation4], %s594
          %596 = dma.done %s592, 128
        $region52: #{_pack_and_match.1} parent=43 // pred_fallthru
          _
      $region44: #{_pack_and_match.1} parent=5 // pred_fallthru
        _
    $region6: #{_pack_and_match.1} parent=1 // loop_footer
      %s21 = sadd.s32 1, %s17
    $region7: #{_pack_and_match.1} parent=1 // loop_footer_branch
      %16 = sbr.rel target = $region3
    $region8: #{_pack_and_match.1} parent=1 // loop_exit
      _
    %597 = vsyncpa [#allocation3], 1
    %s598 = scalar_lea.sflag [#allocation3], 1
    %599 = vsyncpa %s598, 1
    %600 = vsyncpa [#allocation5], 1
    %s601 = scalar_lea.sflag [#allocation5], 1
    %602 = vsyncpa %s601, 1

</llo_original>
